<compile_context>
chip_gen: v7x
topology: tpu7x:2x2x1
jax: 0.10.0
libtpu: 0.0.40
codegen_flags: <defaults>
</compile_context>

<pallas_src>
import jax
import jax.numpy as jnp
from jax.experimental import pallas as pl
from jax.experimental.pallas import tpu as pltpu

# ----------------------------- problem sizes --------------------------------
OBS_DIM = 16
ACT_DIM = 4
EP_DIM = 8
EP_HIDDEN = 32
UP_HIDDEN = 32

OBS_ACT = OBS_DIM + ACT_DIM          # 20 : width of cat(x, lst_a)
XA_PAD = 24                          # cat(x, lst_a) padded to an 8-multiple
ACT_SLAB_W = XA_PAD + UP_HIDDEN      # 56 : [x | lst_a | 0-pad | noise_proj]
HEAD_W = 3 * ACT_DIM                 # 12 : packed [mu | std | log_std]

BATCH = 128                          # whole batch processed in one block

BOTTLE_SIGMA = 1e-4
MIN_LOG_STD = -7.0
MAX_LOG_STD = 2.0


# ----------------------- weight-slab row layout ------------------------------
# All starts are 8-row aligned so every in-kernel slice is a clean (8,*)-tiled view.
R_EW1 = 0                            # ep layer 1 weight, padded   (24, 32)
R_EB1 = 24                           # ep layer 1 bias             (1, 32)
R_WFU = 32                           # fused ew2 @ uw1e            (32, 32)
R_BFU = 64                           # fused eb2 @ uw1e + ub1      (1, 32)
R_UW1X = 72                          # up layer 1 weight, x part   (16, 32)
R_UW2 = 88                           # up layer 2 weight           (32, 32)
R_UB2 = 120                          # up layer 2 bias             (1, 32)
R_UW3 = 128                          # head weight packed          (32, 12) = [W_mu|W_ls|W_ls]
R_UB3 = 160                          # head bias packed            (1, 12)
W_ROWS = 168                         # multiple of 8
W_LANES = 32                         # nothing uses lanes >= 32


# ------------------------------- kernel -------------------------------------
def policy_kernel(act_ref, w_ref, out_ref):
    # activation slab: [x(0:16) | lst_a(16:20) | zeros(20:24) | noise_proj(24:56)]
    act = act_ref[...]
    xa = act[:, :XA_PAD]                       # cat(x, lst_a) padded to 24 cols
    x = act[:, :OBS_DIM]
    nproj = act[:, XA_PAD:XA_PAD + UP_HIDDEN]  # (noise*sigma) @ uw1e, host-folded

    # static 8-row-aligned slices of the packed weight slab
    ew1 = w_ref[R_EW1:R_EW1 + XA_PAD, :]       # (24, 32), rows 20:24 are zero
    eb1 = w_ref[R_EB1:R_EB1 + 1, :]
    wfu = w_ref[R_WFU:R_WFU + EP_HIDDEN, :]    # fused ew2 @ uw1e
    bfu = w_ref[R_BFU:R_BFU + 1, :]            # fused eb2 @ uw1e + ub1
    uw1x = w_ref[R_UW1X:R_UW1X + OBS_DIM, :]
    uw2 = w_ref[R_UW2:R_UW2 + UP_HIDDEN, :]
    ub2 = w_ref[R_UB2:R_UB2 + 1, :]
    uw3 = w_ref[R_UW3:R_UW3 + UP_HIDDEN, :HEAD_W]
    ub3 = w_ref[R_UB3:R_UB3 + 1, :HEAD_W]

    # ---- environment-probe first layer (ep output layer is fused below) ----
    h1 = jnp.tanh(jnp.dot(xa, ew1, preferred_element_type=jnp.float32) + eb1)

    # ---- universe-policy MLP on cat(x, ep), with ep's linear layer fused ----
    # u1 = tanh(x@uw1x + (h1@ew2 + eb2 + noise*sigma)@uw1e + ub1)
    #    = tanh(x@uw1x + h1@wfu + nproj + bfu)
    # (ep.detach() is a no-op for the forward pass)
    u1 = jnp.tanh(
        jnp.dot(h1, wfu, preferred_element_type=jnp.float32)      # on critical chain
        + jnp.dot(x, uw1x, preferred_element_type=jnp.float32)    # off-chain, overlaps
        + nproj
        + bfu
    )
    u2 = jnp.tanh(jnp.dot(u1, uw2, preferred_element_type=jnp.float32) + ub2)

    # ---- packed head: one matmul produces [mu | log_std | log_std] ----
    head = jnp.dot(u2, uw3, preferred_element_type=jnp.float32) + ub3   # (B, 12)

    lane = jax.lax.broadcasted_iota(jnp.int32, head.shape, 1)
    ls = jnp.clip(head, MIN_LOG_STD, MAX_LOG_STD)
    out = jnp.where(
        lane < ACT_DIM, head,                         # lanes 0:4   -> mu
        jnp.where(lane < 2 * ACT_DIM, jnp.exp(ls),    # lanes 4:8   -> std
                  ls),                                # lanes 8:12  -> log_std
    )
    out_ref[...] = out                                # single lane-dense store


# ------------------------------ wrappers --------------------------------------
def pack_weights(p):
    """Pack all weights/biases into one (168, 32) f32 slab (done once)."""
    w = jnp.zeros((W_ROWS, W_LANES), jnp.float32)

    # ep layer 1, padded to 24 rows (pad rows multiply against zero slab cols)
    ew1_pad = jnp.zeros((XA_PAD, EP_HIDDEN), jnp.float32).at[:OBS_ACT, :].set(p["ew1"])
    w = w.at[R_EW1:R_EW1 + XA_PAD, :EP_HIDDEN].set(ew1_pad)
    w = w.at[R_EB1, :EP_HIDDEN].set(p["eb1"][0])

    # fuse ep output layer into up first layer (ep is never an output here)
    w_fuse = p["ew2"] @ p["uw1e"]                     # (32, 32)
    b_fuse = p["eb2"] @ p["uw1e"] + p["ub1"]          # (1, 32)
    w = w.at[R_WFU:R_WFU + EP_HIDDEN, :UP_HIDDEN].set(w_fuse)
    w = w.at[R_BFU, :UP_HIDDEN].set(b_fuse[0])

    w = w.at[R_UW1X:R_UW1X + OBS_DIM, :UP_HIDDEN].set(p["uw1x"])
    w = w.at[R_UW2:R_UW2 + UP_HIDDEN, :UP_HIDDEN].set(p["uw2"])
    w = w.at[R_UB2, :UP_HIDDEN].set(p["ub2"][0])

    # head packed as [W_mu | W_logstd | W_logstd] so the kernel emits the packed
    # [mu | std | log_std] layout directly from one lane-0-aligned matmul.
    uw3, ub3 = p["uw3"], p["ub3"]
    uw3p = jnp.concatenate(
        [uw3[:, :ACT_DIM], uw3[:, ACT_DIM:], uw3[:, ACT_DIM:]], axis=-1)
    ub3p = jnp.concatenate(
        [ub3[:, :ACT_DIM], ub3[:, ACT_DIM:], ub3[:, ACT_DIM:]], axis=-1)
    w = w.at[R_UW3:R_UW3 + UP_HIDDEN, :HEAD_W].set(uw3p)
    w = w.at[R_UB3, :HEAD_W].set(ub3p[0])
    return w


@jax.jit
def policy_forward(x, lst_a, noise, w_slab, uw1e):
    """Returns (mu, std, log_std). h_out is [] for the fc-only RNNBase config."""
    batch = x.shape[0]
    # one activation slab: [x | lst_a | 0-pad | (noise*sigma)@uw1e]  (width 56)
    noise_proj = (noise * BOTTLE_SIGMA) @ uw1e                        # (B, 32)
    pad = jnp.zeros((batch, XA_PAD - OBS_ACT), jnp.float32)
    act = jnp.concatenate([x, lst_a, pad, noise_proj], axis=-1)       # (B, 56)

    packed = pl.pallas_call(
        policy_kernel,
        out_shape=jax.ShapeDtypeStruct((batch, HEAD_W), jnp.float32),
        # whole arrays as single VMEM blocks: no grid, one dependency-chain pass
        in_specs=[
            pl.BlockSpec(memory_space=pltpu.MemorySpace.VMEM),
            pl.BlockSpec(memory_space=pltpu.MemorySpace.VMEM),
        ],
        out_specs=pl.BlockSpec(memory_space=pltpu.MemorySpace.VMEM),
    )(act, w_slab)

    mu = packed[:, :ACT_DIM]
    std = packed[:, ACT_DIM:2 * ACT_DIM]
    log_std = packed[:, 2 * ACT_DIM:]
    return mu, std, log_std


# ------------------------- deterministic init --------------------------------
def init_params(key):
    def dense(k, fan_in, fan_out):
        scale = 1.0 / jnp.sqrt(jnp.float32(fan_in))
        return jax.random.uniform(k, (fan_in, fan_out), jnp.float32, -scale, scale)

    ks = jax.random.split(key, 16)
    p = {}
    # ep: (obs+act) -> EP_HIDDEN (tanh) -> EP_DIM (linear)
    p["ew1"] = dense(ks[0], OBS_ACT, EP_HIDDEN)
    p["eb1"] = jax.random.uniform(ks[1], (1, EP_HIDDEN), jnp.float32, -0.1, 0.1)
    p["ew2"] = dense(ks[2], EP_HIDDEN, EP_DIM)
    p["eb2"] = jax.random.uniform(ks[3], (1, EP_DIM), jnp.float32, -0.1, 0.1)
    # up: (obs+ep) -> UP_HIDDEN (tanh) -> UP_HIDDEN (tanh) -> 2*ACT_DIM (linear)
    p["uw1x"] = dense(ks[4], OBS_DIM, UP_HIDDEN)
    p["uw1e"] = dense(ks[5], EP_DIM, UP_HIDDEN)
    p["ub1"] = jax.random.uniform(ks[6], (1, UP_HIDDEN), jnp.float32, -0.1, 0.1)
    p["uw2"] = dense(ks[7], UP_HIDDEN, UP_HIDDEN)
    p["ub2"] = jax.random.uniform(ks[8], (1, UP_HIDDEN), jnp.float32, -0.1, 0.1)
    p["uw3"] = dense(ks[9], UP_HIDDEN, 2 * ACT_DIM)
    p["ub3"] = jax.random.uniform(ks[10], (1, 2 * ACT_DIM), jnp.float32, -0.1, 0.1)
    return p


# --------------------------- pure-JAX reference -------------------------------
def reference_forward(x, lst_a, noise, p):
    """Unfused reference, matching the PyTorch forward exactly."""
    xa = jnp.concatenate([x, lst_a], axis=-1)
    h1 = jnp.tanh(xa @ p["ew1"] + p["eb1"])
    ep = h1 @ p["ew2"] + p["eb2"] + noise * BOTTLE_SIGMA
    u1 = jnp.tanh(x @ p["uw1x"] + ep @ p["uw1e"] + p["ub1"])
    u2 = jnp.tanh(u1 @ p["uw2"] + p["ub2"])
    out = u2 @ p["uw3"] + p["ub3"]
    mu = out[:, :ACT_DIM]
    log_std = jnp.clip(out[:, ACT_DIM:], MIN_LOG_STD, MAX_LOG_STD)
    return mu, jnp.exp(log_std), log_std


# ---------------------------------- main --------------------------------------
if __name__ == "__main__":
    key = jax.random.PRNGKey(0)
    k_par, k_x, k_a, k_n = jax.random.split(key, 4)

    params = init_params(k_par)
    w_slab = pack_weights(params)

    x = jax.random.normal(k_x, (BATCH, OBS_DIM), jnp.float32)
    lst_a = jax.random.normal(k_a, (BATCH, ACT_DIM), jnp.float32)
    noise = jax.random.normal(k_n, (BATCH, EP_DIM), jnp.float32)   # bottle noise

    mu, std, log_std = policy_forward(x, lst_a, noise, w_slab, params["uw1e"])
    jax.block_until_ready((mu, std, log_std))

    mu_r, std_r, log_std_r = reference_forward(x, lst_a, noise, params)
    assert jnp.allclose(mu, mu_r, atol=1e-5), "mu mismatch"
    assert jnp.allclose(std, std_r, atol=1e-5), "std mismatch"
    assert jnp.allclose(log_std, log_std_r, atol=1e-5), "log_std mismatch"

    # h_out for the fc-only RNNBase configuration is an empty list.
    h_out = []  # noqa: F841

    # TODO(synk): recurrent (gru/lstm) RNNBase layers and rsample() (tanh-squash
    # + log-prob) are outside this fc-only forward config and are not implemented.

    print("KERNEL_OK")
</pallas_src>

<mosaic_0001>
module attributes {stable_mosaic.version = 11 : i64} {
  func.func @policy_kernel(%arg0: memref<128x56xf32, #tpu.memory_space<vmem>>, %arg1: memref<168x32xf32, #tpu.memory_space<vmem>>, %arg2: memref<128x12xf32, #tpu.memory_space<vmem>>) attributes {dimension_semantics = [], scalar_prefetch = 0 : i64, scratch_operands = 0 : i64, tpu.core_type = #tpu.core_type<tc>} {
    %c0 = arith.constant 0 : index
    %c0_0 = arith.constant 0 : index
    %0 = vector.load %arg0[%c0, %c0_0] : memref<128x56xf32, #tpu.memory_space<vmem>>, vector<128x56xf32>
    %1 = vector.extract_strided_slice %0 {offsets = [0, 0], sizes = [128, 24], strides = [1, 1]} : vector<128x56xf32> to vector<128x24xf32>
    %2 = vector.extract_strided_slice %0 {offsets = [0, 0], sizes = [128, 16], strides = [1, 1]} : vector<128x56xf32> to vector<128x16xf32>
    %3 = vector.extract_strided_slice %0 {offsets = [0, 24], sizes = [128, 32], strides = [1, 1]} : vector<128x56xf32> to vector<128x32xf32>
    %c0_1 = arith.constant 0 : index
    %c0_2 = arith.constant 0 : index
    %4 = vector.load %arg1[%c0_1, %c0_2] : memref<168x32xf32, #tpu.memory_space<vmem>>, vector<24x32xf32>
    %c24 = arith.constant 24 : index
    %c0_3 = arith.constant 0 : index
    %5 = vector.load %arg1[%c24, %c0_3] : memref<168x32xf32, #tpu.memory_space<vmem>>, vector<1x32xf32>
    %c32 = arith.constant 32 : index
    %c0_4 = arith.constant 0 : index
    %6 = vector.load %arg1[%c32, %c0_4] : memref<168x32xf32, #tpu.memory_space<vmem>>, vector<32x32xf32>
    %c64 = arith.constant 64 : index
    %c0_5 = arith.constant 0 : index
    %7 = vector.load %arg1[%c64, %c0_5] : memref<168x32xf32, #tpu.memory_space<vmem>>, vector<1x32xf32>
    %c72 = arith.constant 72 : index
    %c0_6 = arith.constant 0 : index
    %8 = vector.load %arg1[%c72, %c0_6] : memref<168x32xf32, #tpu.memory_space<vmem>>, vector<16x32xf32>
    %c88 = arith.constant 88 : index
    %c0_7 = arith.constant 0 : index
    %9 = vector.load %arg1[%c88, %c0_7] : memref<168x32xf32, #tpu.memory_space<vmem>>, vector<32x32xf32>
    %c120 = arith.constant 120 : index
    %c0_8 = arith.constant 0 : index
    %10 = vector.load %arg1[%c120, %c0_8] : memref<168x32xf32, #tpu.memory_space<vmem>>, vector<1x32xf32>
    %c128 = arith.constant 128 : index
    %c0_9 = arith.constant 0 : index
    %11 = vector.load %arg1[%c128, %c0_9] : memref<168x32xf32, #tpu.memory_space<vmem>>, vector<32x12xf32>
    %c160 = arith.constant 160 : index
    %c0_10 = arith.constant 0 : index
    %12 = vector.load %arg1[%c160, %c0_10] : memref<168x32xf32, #tpu.memory_space<vmem>>, vector<1x12xf32>
    %cst = arith.constant dense<0.000000e+00> : vector<128x32xf32>
    %13 = tpu.matmul %1, %4, %cst {dimension_numbers = #tpu.dot_dimension_numbers<[1], [0], [0], [1], [0, 0, 1, 1], [], []>} : vector<128x24xf32>, vector<24x32xf32>, vector<128x32xf32> -> vector<128x32xf32>
    %14 = vector.broadcast %5 : vector<1x32xf32> to vector<128x32xf32>
    %15 = arith.addf %13, %14 : vector<128x32xf32>
    %16 = math.tanh %15 : vector<128x32xf32>
    %cst_11 = arith.constant dense<0.000000e+00> : vector<128x32xf32>
    %17 = tpu.matmul %16, %6, %cst_11 {dimension_numbers = #tpu.dot_dimension_numbers<[1], [0], [0], [1], [0, 0, 1, 1], [], []>} : vector<128x32xf32>, vector<32x32xf32>, vector<128x32xf32> -> vector<128x32xf32>
    %cst_12 = arith.constant dense<0.000000e+00> : vector<128x32xf32>
    %18 = tpu.matmul %2, %8, %cst_12 {dimension_numbers = #tpu.dot_dimension_numbers<[1], [0], [0], [1], [0, 0, 1, 1], [], []>} : vector<128x16xf32>, vector<16x32xf32>, vector<128x32xf32> -> vector<128x32xf32>
    %19 = arith.addf %17, %18 : vector<128x32xf32>
    %20 = arith.addf %19, %3 : vector<128x32xf32>
    %21 = vector.broadcast %7 : vector<1x32xf32> to vector<128x32xf32>
    %22 = arith.addf %20, %21 : vector<128x32xf32>
    %23 = math.tanh %22 : vector<128x32xf32>
    %cst_13 = arith.constant dense<0.000000e+00> : vector<128x32xf32>
    %24 = tpu.matmul %23, %9, %cst_13 {dimension_numbers = #tpu.dot_dimension_numbers<[1], [0], [0], [1], [0, 0, 1, 1], [], []>} : vector<128x32xf32>, vector<32x32xf32>, vector<128x32xf32> -> vector<128x32xf32>
    %25 = vector.broadcast %10 : vector<1x32xf32> to vector<128x32xf32>
    %26 = arith.addf %24, %25 : vector<128x32xf32>
    %27 = math.tanh %26 : vector<128x32xf32>
    %cst_14 = arith.constant dense<0.000000e+00> : vector<128x12xf32>
    %28 = tpu.matmul %27, %11, %cst_14 {dimension_numbers = #tpu.dot_dimension_numbers<[1], [0], [0], [1], [0, 0, 1, 1], [], []>} : vector<128x32xf32>, vector<32x12xf32>, vector<128x12xf32> -> vector<128x12xf32>
    %29 = vector.broadcast %12 : vector<1x12xf32> to vector<128x12xf32>
    %30 = arith.addf %28, %29 : vector<128x12xf32>
    %31 = tpu.iota {dimensions = array<i32: 1>} : vector<128x12xi32>
    %cst_15 = arith.constant -7.000000e+00 : f32
    %cst_16 = arith.constant 2.000000e+00 : f32
    %32 = vector.broadcast %cst_15 : f32 to vector<128x12xf32>
    %33 = arith.maximumf %32, %30 : vector<128x12xf32>
    %34 = vector.broadcast %cst_16 : f32 to vector<128x12xf32>
    %35 = arith.minimumf %34, %33 : vector<128x12xf32>
    %c4_i32 = arith.constant 4 : i32
    %36 = vector.broadcast %c4_i32 : i32 to vector<128x12xi32>
    %37 = arith.cmpi slt, %31, %36 : vector<128x12xi32>
    %c8_i32 = arith.constant 8 : i32
    %38 = vector.broadcast %c8_i32 : i32 to vector<128x12xi32>
    %39 = arith.cmpi slt, %31, %38 : vector<128x12xi32>
    %40 = math.exp %35 : vector<128x12xf32>
    %41 = arith.select %39, %40, %35 : vector<128x12xi1>, vector<128x12xf32>
    %42 = arith.select %37, %30, %41 : vector<128x12xi1>, vector<128x12xf32>
    %c0_17 = arith.constant 0 : index
    %c0_18 = arith.constant 0 : index
    %43 = vector.load %arg2[%c0_17, %c0_18] : memref<128x12xf32, #tpu.memory_space<vmem>>, vector<128x12xf32>
    tpu.vector_store %arg2[%c0_17, %c0_18], %42 {strides = array<i32>} : memref<128x12xf32, #tpu.memory_space<vmem>>, vector<128x12xf32>,
    return
  }
}

</mosaic_0001>

<llo_original>
// kernel: policy_forward.1
$region0: #{policy_forward.1}
  #allocation0 [shape = 'u32[]', space=smem, size = 0x4, offset = 0x4, fixed_abs, tag = 'smem constant byte address 0x4 - core index']
  #allocation1 [shape = 'u32[144,128]{1,0:T(1,128)}', space=vmem, size = 0x12000, scoped, tag = 'internal scratch']
  %s0 = inlined_call_operand.vmem [shape: f32[128,56], index: 0, kind: input, shape index: {}]
  %s1 = inlined_call_operand.vmem [shape: f32[168,32], index: 1, kind: input, shape index: {}]
  %s2 = inlined_call_operand.vmem [shape: f32[128,12], index: 2, kind: output, shape index: {}]
  %s3 = sld [smem:[#allocation0]]
  $region18: #{policy_forward.1} parent=0
    _
  %s5 = ssub.s32 1, %s3
  %s6 = scalar_select 0, %s5, %s3
  // Predicated region
  $region2: #{policy_forward.1} parent=0 // pred_check
    _
  $region3: #{policy_forward.1} parent=0 // pred_check_branch
    %8 = sbr.rel (0) target = $region5
  $region4: #{policy_forward.1} parent=0 // pred_region
    _
  $region5: #{policy_forward.1} parent=0 // pred_fallthru
    _
  // Predicated region
  $region6: #{policy_forward.1} parent=0 // pred_check
    _
  $region7: #{policy_forward.1} parent=0 // pred_check_branch
    %10 = sbr.rel (0) target = $region9
  $region8: #{policy_forward.1} parent=0 // pred_region
    _
  $region9: #{policy_forward.1} parent=0 // pred_fallthru
    _
  %v11 = vld [vmem:[%s0] sm:$0xff]
  %v12 = vld [vmem:[%s0 + $0x8] sm:$0xff]
  %v13 = vld [vmem:[%s0 + $0x10] sm:$0xff]
  %v14 = vld [vmem:[%s0 + $0x18] sm:$0xff]
  %v15 = vld [vmem:[%s0 + $0x20] sm:$0xff]
  %v16 = vld [vmem:[%s0 + $0x28] sm:$0xff]
  %v17 = vld [vmem:[%s0 + $0x30] sm:$0xff]
  %v18 = vld [vmem:[%s0 + $0x38] sm:$0xff]
  %v19 = vld [vmem:[%s0 + $0x40] sm:$0xff]
  %v20 = vld [vmem:[%s0 + $0x48] sm:$0xff]
  %v21 = vld [vmem:[%s0 + $0x50] sm:$0xff]
  %v22 = vld [vmem:[%s0 + $0x58] sm:$0xff]
  %v23 = vld [vmem:[%s0 + $0x60] sm:$0xff]
  %v24 = vld [vmem:[%s0 + $0x68] sm:$0xff]
  %v25 = vld [vmem:[%s0 + $0x70] sm:$0xff]
  %v26 = vld [vmem:[%s0 + $0x78] sm:$0xff]
  %v27 = vld [vmem:[%s1] sm:$0xff]
  %v28 = vld [vmem:[%s1 + $0x8] sm:$0xff]
  %v29 = vld [vmem:[%s1 + $0x10] sm:$0xff]
  %v30 = vld [vmem:[%s1 + $0x18] sm:$0x1]
  %v31 = vld [vmem:[%s1 + $0x20] sm:$0xff]
  %v32 = vld [vmem:[%s1 + $0x28] sm:$0xff]
  %v33 = vld [vmem:[%s1 + $0x30] sm:$0xff]
  %v34 = vld [vmem:[%s1 + $0x38] sm:$0xff]
  %v35 = vld [vmem:[%s1 + $0x40] sm:$0x1]
  %v36 = vld [vmem:[%s1 + $0x48] sm:$0xff]
  %v37 = vld [vmem:[%s1 + $0x50] sm:$0xff]
  %v38 = vld [vmem:[%s1 + $0x58] sm:$0xff]
  %v39 = vld [vmem:[%s1 + $0x60] sm:$0xff]
  %v40 = vld [vmem:[%s1 + $0x68] sm:$0xff]
  %v41 = vld [vmem:[%s1 + $0x70] sm:$0xff]
  %v42 = vld [vmem:[%s1 + $0x78] sm:$0x1]
  %v43 = vld [vmem:[%s1 + $0x80] sm:$0xff]
  %v44 = vld [vmem:[%s1 + $0x88] sm:$0xff]
  %v45 = vld [vmem:[%s1 + $0x90] sm:$0xff]
  %v46 = vld [vmem:[%s1 + $0x98] sm:$0xff]
  %v47 = vld [vmem:[%s1 + $0xa0] sm:$0x1]
  %v48 = vlaneseq
  %v49 = vshrl.u32 %v48, 7
  %v50 = vsub.s32 0, %v49
  %v51 = vrot.slane %v30, %v50
  %vm52 = vcmask 195584
  %v54 = vsel %vm52, %v11, 0
  %v57 = vsel %vm52, %v12, 0
  %v60 = vsel %vm52, %v13, 0
  %v63 = vsel %vm52, %v14, 0
  %v66 = vsel %vm52, %v15, 0
  %v69 = vsel %vm52, %v16, 0
  %v72 = vsel %vm52, %v17, 0
  %v75 = vsel %vm52, %v18, 0
  %v78 = vsel %vm52, %v19, 0
  %v81 = vsel %vm52, %v20, 0
  %v84 = vsel %vm52, %v21, 0
  %v87 = vsel %vm52, %v22, 0
  %v90 = vsel %vm52, %v23, 0
  %v93 = vsel %vm52, %v24, 0
  %v96 = vsel %vm52, %v25, 0
  %v99 = vsel %vm52, %v26, 0
  %101 = vmatprep.subr.mxu0 0.0
  %102 = vmatpush1.msra.mxu0 %v27
  %103 = vmatprep.subr.mxu0 0.0
  %104 = vmatpush1.msra.mxu0 %v28
  %105 = vmatprep.subr.mxu0 0.0
  %106 = vmatpush1.msra.mxu0 %v29
  %107 = vmatprep.subr.mxu0 0.0
  %108 = vmatpush1.msra.mxu0 0.0
  %109 = vmatprep.subr.mxu0 0.0
  %110 = vmatpush1.msra.mxu0 0.0
  %111 = vmatprep.subr.mxu0 0.0
  %112 = vmatpush1.msra.mxu0 0.0
  %113 = vmatprep.subr.mxu0 0.0
  %114 = vmatpush1.msra.mxu0 0.0
  %115 = vmatprep.subr.mxu0 0.0
  %116 = vmatpush1.msra.mxu0 0.0
  %117 = vmatprep.subr.mxu0 0.0
  %118 = vmatpush1.msra.mxu0 0.0
  %119 = vmatprep.subr.mxu0 0.0
  %120 = vmatpush1.msra.mxu0 0.0
  %121 = vmatprep.subr.mxu0 0.0
  %122 = vmatpush1.msra.mxu0 0.0
  %123 = vmatprep.subr.mxu0 0.0
  %124 = vmatpush1.msra.mxu0 0.0
  %125 = vmatprep.subr.mxu0 0.0
  %126 = vmatpush1.msra.mxu0 0.0
  %127 = vmatprep.subr.mxu0 0.0
  %128 = vmatpush1.msra.mxu0 0.0
  %129 = vmatprep.subr.mxu0 0.0
  %130 = vmatpush1.msra.mxu0 0.0
  %131 = vmatprep.subr.mxu0 0.0
  %132 = vmatpush1.msra.mxu0 0.0
  %133 = vmatprep.subr.mxu0 0.0
  %134 = vmatpush1.msra.mxu0 0.0
  %135 = vmatprep.subr.mxu0 0.0
  %136 = vmatpush1.msra.mxu0 0.0
  %137 = vmatprep.subr.mxu0 0.0
  %138 = vmatpush1.msra.mxu0 0.0
  %139 = vmatprep.subr.mxu0 0.0
  %140 = vmatpush1.msra.mxu0 0.0
  %141 = vmatprep.subr.mxu0 0.0
  %142 = vmatpush1.msra.mxu0 0.0
  %143 = vmatprep.subr.mxu0 0.0
  %144 = vmatpush1.msra.mxu0 0.0
  %145 = vmatprep.subr.mxu0 0.0
  %146 = vmatpush1.msra.mxu0 0.0
  %147 = vmatprep.subr.mxu0 0.0
  %148 = vmatpush1.msra.mxu0 0.0
  %149 = vmatprep.subr.mxu0 0.0
  %150 = vmatpush1.msra.mxu0 0.0
  %151 = vmatprep.subr.mxu0 0.0
  %152 = vmatpush1.msra.mxu0 0.0
  %153 = vmatprep.subr.mxu0 0.0
  %154 = vmatpush1.msra.mxu0 0.0
  %155 = vmatprep.subr.mxu0 0.0
  %156 = vmatpush1.msra.mxu0 0.0
  %157 = vmatprep.subr.mxu0 0.0
  %158 = vmatpush1.msra.mxu0 0.0
  %159 = vmatprep.subr.mxu0 0.0
  %160 = vmatpush1.msra.mxu0 0.0
  %161 = vmatprep.subr.mxu0 0.0
  %162 = vmatpush1.msra.mxu0 0.0
  %163 = vmatprep.subr.mxu0 0.0
  %164 = vmatpush1.msra.mxu0 0.0
  %165 = vmatprep.mubr.f32.mxu0 0.0
  %166 = vmatmul.mubr.f32.gmra.mrb[0].mxu0 %v54
  %v167 = vpop.f32.mrb[0].mxu0
  %v168 = vadd.f32 %v51, %v167
  %v169 = vpop.f32.mrb[0].mxu0
  %170 = vmatprep.mubr.f32.mxu0 0.0
  %171 = vmatmul.mubr.f32.gmra.mrb[0].mxu0 %v57
  %v172 = vpop.f32.mrb[0].mxu0
  %v173 = vadd.f32 %v51, %v172
  %v174 = vpop.f32.mrb[0].mxu0
  %175 = vmatprep.mubr.f32.mxu0 0.0
  %176 = vmatmul.mubr.f32.gmra.mrb[0].mxu0 %v60
  %v177 = vpop.f32.mrb[0].mxu0
  %v178 = vadd.f32 %v51, %v177
  %v179 = vpop.f32.mrb[0].mxu0
  %180 = vmatprep.mubr.f32.mxu0 0.0
  %181 = vmatmul.mubr.f32.gmra.mrb[0].mxu0 %v63
  %v182 = vpop.f32.mrb[0].mxu0
  %v183 = vadd.f32 %v51, %v182
  %v184 = vpop.f32.mrb[0].mxu0
  %185 = vmatprep.mubr.f32.mxu0 0.0
  %186 = vmatmul.mubr.f32.gmra.mrb[0].mxu0 %v66
  %v187 = vpop.f32.mrb[0].mxu0
  %v188 = vadd.f32 %v51, %v187
  %v189 = vpop.f32.mrb[0].mxu0
  %190 = vmatprep.mubr.f32.mxu0 0.0
  %191 = vmatmul.mubr.f32.gmra.mrb[0].mxu0 %v69
  %v192 = vpop.f32.mrb[0].mxu0
  %v193 = vadd.f32 %v51, %v192
  %v194 = vpop.f32.mrb[0].mxu0
  %195 = vmatprep.mubr.f32.mxu0 0.0
  %196 = vmatmul.mubr.f32.gmra.mrb[0].mxu0 %v72
  %v197 = vpop.f32.mrb[0].mxu0
  %v198 = vadd.f32 %v51, %v197
  %v199 = vpop.f32.mrb[0].mxu0
  %200 = vmatprep.mubr.f32.mxu0 0.0
  %201 = vmatmul.mubr.f32.gmra.mrb[0].mxu0 %v75
  %v202 = vpop.f32.mrb[0].mxu0
  %v203 = vadd.f32 %v51, %v202
  %v204 = vpop.f32.mrb[0].mxu0
  %205 = vmatprep.mubr.f32.mxu0 0.0
  %206 = vmatmul.mubr.f32.gmra.mrb[0].mxu0 %v78
  %v207 = vpop.f32.mrb[0].mxu0
  %v208 = vadd.f32 %v51, %v207
  %v209 = vpop.f32.mrb[0].mxu0
  %210 = vmatprep.mubr.f32.mxu0 0.0
  %211 = vmatmul.mubr.f32.gmra.mrb[0].mxu0 %v81
  %v212 = vpop.f32.mrb[0].mxu0
  %v213 = vadd.f32 %v51, %v212
  %v214 = vpop.f32.mrb[0].mxu0
  %215 = vmatprep.mubr.f32.mxu0 0.0
  %216 = vmatmul.mubr.f32.gmra.mrb[0].mxu0 %v84
  %v217 = vpop.f32.mrb[0].mxu0
  %v218 = vadd.f32 %v51, %v217
  %v219 = vpop.f32.mrb[0].mxu0
  %220 = vmatprep.mubr.f32.mxu0 0.0
  %221 = vmatmul.mubr.f32.gmra.mrb[0].mxu0 %v87
  %v222 = vpop.f32.mrb[0].mxu0
  %v223 = vadd.f32 %v51, %v222
  %v224 = vpop.f32.mrb[0].mxu0
  %225 = vmatprep.mubr.f32.mxu0 0.0
  %226 = vmatmul.mubr.f32.gmra.mrb[0].mxu0 %v90
  %v227 = vpop.f32.mrb[0].mxu0
  %v228 = vadd.f32 %v51, %v227
  %v229 = vpop.f32.mrb[0].mxu0
  %230 = vmatprep.mubr.f32.mxu0 0.0
  %231 = vmatmul.mubr.f32.gmra.mrb[0].mxu0 %v93
  %v232 = vpop.f32.mrb[0].mxu0
  %v233 = vadd.f32 %v51, %v232
  %v234 = vpop.f32.mrb[0].mxu0
  %235 = vmatprep.mubr.f32.mxu0 0.0
  %236 = vmatmul.mubr.f32.gmra.mrb[0].mxu0 %v96
  %v237 = vpop.f32.mrb[0].mxu0
  %v238 = vadd.f32 %v51, %v237
  %v239 = vpop.f32.mrb[0].mxu0
  %240 = vmatprep.mubr.f32.mxu0 0.0
  %241 = vmatmul.mubr.f32.gmra.mrb[0].mxu0 %v99
  %v242 = vpop.f32.mrb[0].mxu0
  %v243 = vadd.f32 %v51, %v242
  %v244 = vpop.f32.mrb[0].mxu0
  %245 = vdwg.mxu0
  %v246 = vtanh.pop %v168
  %v247 = vtanh.pop %v173
  %v248 = vtanh.pop %v178
  %v249 = vtanh.pop %v183
  %v250 = vtanh.pop %v188
  %v251 = vtanh.pop %v193
  %v252 = vtanh.pop %v198
  %v253 = vtanh.pop %v203
  %v254 = vtanh.pop %v208
  %v255 = vtanh.pop %v213
  %v256 = vtanh.pop %v218
  %v257 = vtanh.pop %v223
  %v258 = vtanh.pop %v228
  %v259 = vtanh.pop %v233
  %v260 = vtanh.pop %v238
  %v261 = vtanh.pop %v243
  %vm262 = vcmask 130048
  %v263 = vsel %vm262, %v11, 0
  %v265 = vsel %vm262, %v12, 0
  %v267 = vsel %vm262, %v13, 0
  %v269 = vsel %vm262, %v14, 0
  %v271 = vsel %vm262, %v15, 0
  %v273 = vsel %vm262, %v16, 0
  %v275 = vsel %vm262, %v17, 0
  %v277 = vsel %vm262, %v18, 0
  %v279 = vsel %vm262, %v19, 0
  %v281 = vsel %vm262, %v20, 0
  %v283 = vsel %vm262, %v21, 0
  %v285 = vsel %vm262, %v22, 0
  %v287 = vsel %vm262, %v23, 0
  %v289 = vsel %vm262, %v24, 0
  %v291 = vsel %vm262, %v25, 0
  %v293 = vsel %vm262, %v26, 0
  %295 = vmatprep.subr.mxu0 0.0
  %296 = vmatpush1.msra.mxu0 %v36
  %297 = vmatprep.subr.mxu0 0.0
  %298 = vmatpush1.msra.mxu0 %v37
  %299 = vmatprep.subr.mxu0 0.0
  %300 = vmatpush1.msra.mxu0 0.0
  %301 = vmatprep.subr.mxu0 0.0
  %302 = vmatpush1.msra.mxu0 0.0
  %303 = vmatprep.subr.mxu0 0.0
  %304 = vmatpush1.msra.mxu0 0.0
  %305 = vmatprep.subr.mxu0 0.0
  %306 = vmatpush1.msra.mxu0 0.0
  %307 = vmatprep.subr.mxu0 0.0
  %308 = vmatpush1.msra.mxu0 0.0
  %309 = vmatprep.subr.mxu0 0.0
  %310 = vmatpush1.msra.mxu0 0.0
  %311 = vmatprep.subr.mxu0 0.0
  %312 = vmatpush1.msra.mxu0 0.0
  %313 = vmatprep.subr.mxu0 0.0
  %314 = vmatpush1.msra.mxu0 0.0
  %315 = vmatprep.subr.mxu0 0.0
  %316 = vmatpush1.msra.mxu0 0.0
  %317 = vmatprep.subr.mxu0 0.0
  %318 = vmatpush1.msra.mxu0 0.0
  %319 = vmatprep.subr.mxu0 0.0
  %320 = vmatpush1.msra.mxu0 0.0
  %321 = vmatprep.subr.mxu0 0.0
  %322 = vmatpush1.msra.mxu0 0.0
  %323 = vmatprep.subr.mxu0 0.0
  %324 = vmatpush1.msra.mxu0 0.0
  %325 = vmatprep.subr.mxu0 0.0
  %326 = vmatpush1.msra.mxu0 0.0
  %327 = vmatprep.subr.mxu0 0.0
  %328 = vmatpush1.msra.mxu0 0.0
  %329 = vmatprep.subr.mxu0 0.0
  %330 = vmatpush1.msra.mxu0 0.0
  %331 = vmatprep.subr.mxu0 0.0
  %332 = vmatpush1.msra.mxu0 0.0
  %333 = vmatprep.subr.mxu0 0.0
  %334 = vmatpush1.msra.mxu0 0.0
  %335 = vmatprep.subr.mxu0 0.0
  %336 = vmatpush1.msra.mxu0 0.0
  %337 = vmatprep.subr.mxu0 0.0
  %338 = vmatpush1.msra.mxu0 0.0
  %339 = vmatprep.subr.mxu0 0.0
  %340 = vmatpush1.msra.mxu0 0.0
  %341 = vmatprep.subr.mxu0 0.0
  %342 = vmatpush1.msra.mxu0 0.0
  %343 = vmatprep.subr.mxu0 0.0
  %344 = vmatpush1.msra.mxu0 0.0
  %345 = vmatprep.subr.mxu0 0.0
  %346 = vmatpush1.msra.mxu0 0.0
  %347 = vmatprep.subr.mxu0 0.0
  %348 = vmatpush1.msra.mxu0 0.0
  %349 = vmatprep.subr.mxu0 0.0
  %350 = vmatpush1.msra.mxu0 0.0
  %351 = vmatprep.subr.mxu0 0.0
  %352 = vmatpush1.msra.mxu0 0.0
  %353 = vmatprep.subr.mxu0 0.0
  %354 = vmatpush1.msra.mxu0 0.0
  %355 = vmatprep.subr.mxu0 0.0
  %356 = vmatpush1.msra.mxu0 0.0
  %357 = vmatprep.subr.mxu0 0.0
  %358 = vmatpush1.msra.mxu0 0.0
  %359 = vmatprep.mubr.f32.mxu0 0.0
  %360 = vmatmul.mubr.f32.gmra.mrb[0].mxu0 %v263
  %v361 = vpop.f32.mrb[0].mxu0
  %v362 = vadd.f32 0.0, %v361
  %v363 = vpop.f32.mrb[0].mxu0
  %364 = vmatprep.mubr.f32.mxu0 0.0
  %365 = vmatmul.mubr.f32.gmra.mrb[0].mxu0 %v265
  %v366 = vpop.f32.mrb[0].mxu0
  %v367 = vadd.f32 0.0, %v366
  %v368 = vpop.f32.mrb[0].mxu0
  %369 = vmatprep.mubr.f32.mxu0 0.0
  %370 = vmatmul.mubr.f32.gmra.mrb[0].mxu0 %v267
  %v371 = vpop.f32.mrb[0].mxu0
  %v372 = vadd.f32 0.0, %v371
  %v373 = vpop.f32.mrb[0].mxu0
  %374 = vmatprep.mubr.f32.mxu0 0.0
  %375 = vmatmul.mubr.f32.gmra.mrb[0].mxu0 %v269
  %v376 = vpop.f32.mrb[0].mxu0
  %v377 = vadd.f32 0.0, %v376
  %v378 = vpop.f32.mrb[0].mxu0
  %379 = vmatprep.mubr.f32.mxu0 0.0
  %380 = vmatmul.mubr.f32.gmra.mrb[0].mxu0 %v271
  %v381 = vpop.f32.mrb[0].mxu0
  %v382 = vadd.f32 0.0, %v381
  %v383 = vpop.f32.mrb[0].mxu0
  %384 = vmatprep.mubr.f32.mxu0 0.0
  %385 = vmatmul.mubr.f32.gmra.mrb[0].mxu0 %v273
  %v386 = vpop.f32.mrb[0].mxu0
  %v387 = vadd.f32 0.0, %v386
  %v388 = vpop.f32.mrb[0].mxu0
  %389 = vmatprep.mubr.f32.mxu0 0.0
  %390 = vmatmul.mubr.f32.gmra.mrb[0].mxu0 %v275
  %v391 = vpop.f32.mrb[0].mxu0
  %v392 = vadd.f32 0.0, %v391
  %v393 = vpop.f32.mrb[0].mxu0
  %394 = vmatprep.mubr.f32.mxu0 0.0
  %395 = vmatmul.mubr.f32.gmra.mrb[0].mxu0 %v277
  %v396 = vpop.f32.mrb[0].mxu0
  %v397 = vadd.f32 0.0, %v396
  %v398 = vpop.f32.mrb[0].mxu0
  %399 = vmatprep.mubr.f32.mxu0 0.0
  %400 = vmatmul.mubr.f32.gmra.mrb[0].mxu0 %v279
  %v401 = vpop.f32.mrb[0].mxu0
  %v402 = vadd.f32 0.0, %v401
  %v403 = vpop.f32.mrb[0].mxu0
  %404 = vmatprep.mubr.f32.mxu0 0.0
  %405 = vmatmul.mubr.f32.gmra.mrb[0].mxu0 %v281
  %v406 = vpop.f32.mrb[0].mxu0
  %v407 = vadd.f32 0.0, %v406
  %v408 = vpop.f32.mrb[0].mxu0
  %409 = vmatprep.mubr.f32.mxu0 0.0
  %410 = vmatmul.mubr.f32.gmra.mrb[0].mxu0 %v283
  %v411 = vpop.f32.mrb[0].mxu0
  %v412 = vadd.f32 0.0, %v411
  %v413 = vpop.f32.mrb[0].mxu0
  %414 = vmatprep.mubr.f32.mxu0 0.0
  %415 = vmatmul.mubr.f32.gmra.mrb[0].mxu0 %v285
  %v416 = vpop.f32.mrb[0].mxu0
  %v417 = vadd.f32 0.0, %v416
  %v418 = vpop.f32.mrb[0].mxu0
  %419 = vmatprep.mubr.f32.mxu0 0.0
  %420 = vmatmul.mubr.f32.gmra.mrb[0].mxu0 %v287
  %v421 = vpop.f32.mrb[0].mxu0
  %v422 = vadd.f32 0.0, %v421
  %v423 = vpop.f32.mrb[0].mxu0
  %424 = vmatprep.mubr.f32.mxu0 0.0
  %425 = vmatmul.mubr.f32.gmra.mrb[0].mxu0 %v289
  %v426 = vpop.f32.mrb[0].mxu0
  %v427 = vadd.f32 0.0, %v426
  %v428 = vpop.f32.mrb[0].mxu0
  %429 = vmatprep.mubr.f32.mxu0 0.0
  %430 = vmatmul.mubr.f32.gmra.mrb[0].mxu0 %v291
  %v431 = vpop.f32.mrb[0].mxu0
  %v432 = vadd.f32 0.0, %v431
  %v433 = vpop.f32.mrb[0].mxu0
  %434 = vmatprep.mubr.f32.mxu0 0.0
  %435 = vmatmul.mubr.f32.gmra.mrb[0].mxu0 %v293
  %v436 = vpop.f32.mrb[0].mxu0
  %v437 = vadd.f32 0.0, %v436
  %v438 = vpop.f32.mrb[0].mxu0
  %439 = vdwg.mxu0
  %vm440 = vcmask 261120
  %v442 = vsel %vm440, %v246, 0
  %v445 = vsel %vm440, %v247, 0
  %v448 = vsel %vm440, %v248, 0
  %v451 = vsel %vm440, %v249, 0
  %v454 = vsel %vm440, %v250, 0
  %v457 = vsel %vm440, %v251, 0
  %v460 = vsel %vm440, %v252, 0
  %v463 = vsel %vm440, %v253, 0
  %v466 = vsel %vm440, %v254, 0
  %v469 = vsel %vm440, %v255, 0
  %v472 = vsel %vm440, %v256, 0
  %v475 = vsel %vm440, %v257, 0
  %v478 = vsel %vm440, %v258, 0
  %v481 = vsel %vm440, %v259, 0
  %v484 = vsel %vm440, %v260, 0
  %v487 = vsel %vm440, %v261, 0
  %489 = vmatprep.subr.mxu0 0.0
  %490 = vmatpush1.msra.mxu0 %v31
  %491 = vmatprep.subr.mxu0 0.0
  %492 = vmatpush1.msra.mxu0 %v32
  %493 = vmatprep.subr.mxu0 0.0
  %494 = vmatpush1.msra.mxu0 %v33
  %495 = vmatprep.subr.mxu0 0.0
  %496 = vmatpush1.msra.mxu0 %v34
  %497 = vmatprep.subr.mxu0 0.0
  %498 = vmatpush1.msra.mxu0 0.0
  %499 = vmatprep.subr.mxu0 0.0
  %500 = vmatpush1.msra.mxu0 0.0
  %501 = vmatprep.subr.mxu0 0.0
  %502 = vmatpush1.msra.mxu0 0.0
  %503 = vmatprep.subr.mxu0 0.0
  %504 = vmatpush1.msra.mxu0 0.0
  %505 = vmatprep.subr.mxu0 0.0
  %506 = vmatpush1.msra.mxu0 0.0
  %507 = vmatprep.subr.mxu0 0.0
  %508 = vmatpush1.msra.mxu0 0.0
  %509 = vmatprep.subr.mxu0 0.0
  %510 = vmatpush1.msra.mxu0 0.0
  %511 = vmatprep.subr.mxu0 0.0
  %512 = vmatpush1.msra.mxu0 0.0
  %513 = vmatprep.subr.mxu0 0.0
  %514 = vmatpush1.msra.mxu0 0.0
  %515 = vmatprep.subr.mxu0 0.0
  %516 = vmatpush1.msra.mxu0 0.0
  %517 = vmatprep.subr.mxu0 0.0
  %518 = vmatpush1.msra.mxu0 0.0
  %519 = vmatprep.subr.mxu0 0.0
  %520 = vmatpush1.msra.mxu0 0.0
  %521 = vmatprep.subr.mxu0 0.0
  %522 = vmatpush1.msra.mxu0 0.0
  %523 = vmatprep.subr.mxu0 0.0
  %524 = vmatpush1.msra.mxu0 0.0
  %525 = vmatprep.subr.mxu0 0.0
  %526 = vmatpush1.msra.mxu0 0.0
  %527 = vmatprep.subr.mxu0 0.0
  %528 = vmatpush1.msra.mxu0 0.0
  %529 = vmatprep.subr.mxu0 0.0
  %530 = vmatpush1.msra.mxu0 0.0
  %531 = vmatprep.subr.mxu0 0.0
  %532 = vmatpush1.msra.mxu0 0.0
  %533 = vmatprep.subr.mxu0 0.0
  %534 = vmatpush1.msra.mxu0 0.0
  %535 = vmatprep.subr.mxu0 0.0
  %536 = vmatpush1.msra.mxu0 0.0
  %537 = vmatprep.subr.mxu0 0.0
  %538 = vmatpush1.msra.mxu0 0.0
  %539 = vmatprep.subr.mxu0 0.0
  %540 = vmatpush1.msra.mxu0 0.0
  %541 = vmatprep.subr.mxu0 0.0
  %542 = vmatpush1.msra.mxu0 0.0
  %543 = vmatprep.subr.mxu0 0.0
  %544 = vmatpush1.msra.mxu0 0.0
  %545 = vmatprep.subr.mxu0 0.0
  %546 = vmatpush1.msra.mxu0 0.0
  %547 = vmatprep.subr.mxu0 0.0
  %548 = vmatpush1.msra.mxu0 0.0
  %549 = vmatprep.subr.mxu0 0.0
  %550 = vmatpush1.msra.mxu0 0.0
  %551 = vmatprep.subr.mxu0 0.0
  %552 = vmatpush1.msra.mxu0 0.0
  %553 = vmatprep.mubr.f32.mxu0 0.0
  %554 = vmatmul.mubr.f32.gmra.mrb[0].mxu0 %v442
  %v555 = vpop.f32.mrb[0].mxu0
  %v556 = vadd.f32 %v362, %v555
  %v557 = vpop.f32.mrb[0].mxu0
  %558 = vmatprep.mubr.f32.mxu0 0.0
  %559 = vmatmul.mubr.f32.gmra.mrb[0].mxu0 %v445
  %v560 = vpop.f32.mrb[0].mxu0
  %v561 = vadd.f32 %v367, %v560
  %v562 = vpop.f32.mrb[0].mxu0
  %563 = vmatprep.mubr.f32.mxu0 0.0
  %564 = vmatmul.mubr.f32.gmra.mrb[0].mxu0 %v448
  %v565 = vpop.f32.mrb[0].mxu0
  %v566 = vadd.f32 %v372, %v565
  %v567 = vpop.f32.mrb[0].mxu0
  %568 = vmatprep.mubr.f32.mxu0 0.0
  %569 = vmatmul.mubr.f32.gmra.mrb[0].mxu0 %v451
  %v570 = vpop.f32.mrb[0].mxu0
  %v571 = vadd.f32 %v377, %v570
  %v572 = vpop.f32.mrb[0].mxu0
  %573 = vmatprep.mubr.f32.mxu0 0.0
  %574 = vmatmul.mubr.f32.gmra.mrb[0].mxu0 %v454
  %v575 = vpop.f32.mrb[0].mxu0
  %v576 = vadd.f32 %v382, %v575
  %v577 = vpop.f32.mrb[0].mxu0
  %578 = vmatprep.mubr.f32.mxu0 0.0
  %579 = vmatmul.mubr.f32.gmra.mrb[0].mxu0 %v457
  %v580 = vpop.f32.mrb[0].mxu0
  %v581 = vadd.f32 %v387, %v580
  %v582 = vpop.f32.mrb[0].mxu0
  %583 = vmatprep.mubr.f32.mxu0 0.0
  %584 = vmatmul.mubr.f32.gmra.mrb[0].mxu0 %v460
  %v585 = vpop.f32.mrb[0].mxu0
  %v586 = vadd.f32 %v392, %v585
  %v587 = vpop.f32.mrb[0].mxu0
  %588 = vmatprep.mubr.f32.mxu0 0.0
  %589 = vmatmul.mubr.f32.gmra.mrb[0].mxu0 %v463
  %v590 = vpop.f32.mrb[0].mxu0
  %v591 = vadd.f32 %v397, %v590
  %v592 = vpop.f32.mrb[0].mxu0
  %593 = vmatprep.mubr.f32.mxu0 0.0
  %594 = vmatmul.mubr.f32.gmra.mrb[0].mxu0 %v466
  %v595 = vpop.f32.mrb[0].mxu0
  %v596 = vadd.f32 %v402, %v595
  %v597 = vpop.f32.mrb[0].mxu0
  %598 = vmatprep.mubr.f32.mxu0 0.0
  %599 = vmatmul.mubr.f32.gmra.mrb[0].mxu0 %v469
  %v600 = vpop.f32.mrb[0].mxu0
  %v601 = vadd.f32 %v407, %v600
  %v602 = vpop.f32.mrb[0].mxu0
  %603 = vmatprep.mubr.f32.mxu0 0.0
  %604 = vmatmul.mubr.f32.gmra.mrb[0].mxu0 %v472
  %v605 = vpop.f32.mrb[0].mxu0
  %v606 = vadd.f32 %v412, %v605
  %v607 = vpop.f32.mrb[0].mxu0
  %608 = vmatprep.mubr.f32.mxu0 0.0
  %609 = vmatmul.mubr.f32.gmra.mrb[0].mxu0 %v475
  %v610 = vpop.f32.mrb[0].mxu0
  %v611 = vadd.f32 %v417, %v610
  %v612 = vpop.f32.mrb[0].mxu0
  %613 = vmatprep.mubr.f32.mxu0 0.0
  %614 = vmatmul.mubr.f32.gmra.mrb[0].mxu0 %v478
  %v615 = vpop.f32.mrb[0].mxu0
  %v616 = vadd.f32 %v422, %v615
  %v617 = vpop.f32.mrb[0].mxu0
  %618 = vmatprep.mubr.f32.mxu0 0.0
  %619 = vmatmul.mubr.f32.gmra.mrb[0].mxu0 %v481
  %v620 = vpop.f32.mrb[0].mxu0
  %v621 = vadd.f32 %v427, %v620
  %v622 = vpop.f32.mrb[0].mxu0
  %623 = vmatprep.mubr.f32.mxu0 0.0
  %624 = vmatmul.mubr.f32.gmra.mrb[0].mxu0 %v484
  %v625 = vpop.f32.mrb[0].mxu0
  %v626 = vadd.f32 %v432, %v625
  %v627 = vpop.f32.mrb[0].mxu0
  %628 = vmatprep.mubr.f32.mxu0 0.0
  %629 = vmatmul.mubr.f32.gmra.mrb[0].mxu0 %v487
  %v630 = vpop.f32.mrb[0].mxu0
  %v631 = vadd.f32 %v437, %v630
  %v632 = vpop.f32.mrb[0].mxu0
  %633 = vdwg.mxu0
  %634 = vrot.lane.b32.xlu0 %v11, 104
  %v635 = vpop.permute.xlu0 %634
  %636 = vrot.lane.b32.xlu0 %v12, 104
  %v637 = vpop.permute.xlu0 %636
  %638 = vrot.lane.b32.xlu0 %v13, 104
  %v639 = vpop.permute.xlu0 %638
  %640 = vrot.lane.b32.xlu0 %v14, 104
  %v641 = vpop.permute.xlu0 %640
  %642 = vrot.lane.b32.xlu0 %v15, 104
  %v643 = vpop.permute.xlu0 %642
  %644 = vrot.lane.b32.xlu0 %v16, 104
  %v645 = vpop.permute.xlu0 %644
  %646 = vrot.lane.b32.xlu0 %v17, 104
  %v647 = vpop.permute.xlu0 %646
  %648 = vrot.lane.b32.xlu0 %v18, 104
  %v649 = vpop.permute.xlu0 %648
  %650 = vrot.lane.b32.xlu0 %v19, 104
  %v651 = vpop.permute.xlu0 %650
  %652 = vrot.lane.b32.xlu0 %v20, 104
  %v653 = vpop.permute.xlu0 %652
  %654 = vrot.lane.b32.xlu0 %v21, 104
  %v655 = vpop.permute.xlu0 %654
  %656 = vrot.lane.b32.xlu0 %v22, 104
  %v657 = vpop.permute.xlu0 %656
  %658 = vrot.lane.b32.xlu0 %v23, 104
  %v659 = vpop.permute.xlu0 %658
  %660 = vrot.lane.b32.xlu0 %v24, 104
  %v661 = vpop.permute.xlu0 %660
  %662 = vrot.lane.b32.xlu0 %v25, 104
  %v663 = vpop.permute.xlu0 %662
  %664 = vrot.lane.b32.xlu0 %v26, 104
  %v665 = vpop.permute.xlu0 %664
  %v682 = vadd.f32 %v556, %v635
  %v683 = vadd.f32 %v561, %v637
  %v684 = vadd.f32 %v566, %v639
  %v685 = vadd.f32 %v571, %v641
  %v686 = vadd.f32 %v576, %v643
  %v687 = vadd.f32 %v581, %v645
  %v688 = vadd.f32 %v586, %v647
  %v689 = vadd.f32 %v591, %v649
  %v690 = vadd.f32 %v596, %v651
  %v691 = vadd.f32 %v601, %v653
  %v692 = vadd.f32 %v606, %v655
  %v693 = vadd.f32 %v611, %v657
  %v694 = vadd.f32 %v616, %v659
  %v695 = vadd.f32 %v621, %v661
  %v696 = vadd.f32 %v626, %v663
  %v697 = vadd.f32 %v631, %v665
  %v698 = vlaneseq
  %v699 = vshrl.u32 %v698, 7
  %v700 = vsub.s32 0, %v699
  %v701 = vrot.slane %v35, %v700
  %v702 = vadd.f32 %v682, %v701
  %v703 = vadd.f32 %v683, %v701
  %v704 = vadd.f32 %v684, %v701
  %v705 = vadd.f32 %v685, %v701
  %v706 = vadd.f32 %v686, %v701
  %v707 = vadd.f32 %v687, %v701
  %v708 = vadd.f32 %v688, %v701
  %v709 = vadd.f32 %v689, %v701
  %v710 = vadd.f32 %v690, %v701
  %v711 = vadd.f32 %v691, %v701
  %v712 = vadd.f32 %v692, %v701
  %v713 = vadd.f32 %v693, %v701
  %v714 = vadd.f32 %v694, %v701
  %v715 = vadd.f32 %v695, %v701
  %v716 = vadd.f32 %v696, %v701
  %v717 = vadd.f32 %v697, %v701
  %v718 = vtanh.pop %v702
  %v719 = vtanh.pop %v703
  %v720 = vtanh.pop %v704
  %v721 = vtanh.pop %v705
  %v722 = vtanh.pop %v706
  %v723 = vtanh.pop %v707
  %v724 = vtanh.pop %v708
  %v725 = vtanh.pop %v709
  %v726 = vtanh.pop %v710
  %v727 = vtanh.pop %v711
  %v728 = vtanh.pop %v712
  %v729 = vtanh.pop %v713
  %v730 = vtanh.pop %v714
  %v731 = vtanh.pop %v715
  %v732 = vtanh.pop %v716
  %v733 = vtanh.pop %v717
  %v734 = vlaneseq
  %v735 = vshrl.u32 %v734, 7
  %v736 = vsub.s32 0, %v735
  %v737 = vrot.slane %v42, %v736
  %v739 = vsel %vm440, %v718, 0
  %v742 = vsel %vm440, %v719, 0
  %v745 = vsel %vm440, %v720, 0
  %v748 = vsel %vm440, %v721, 0
  %v751 = vsel %vm440, %v722, 0
  %v754 = vsel %vm440, %v723, 0
  %v757 = vsel %vm440, %v724, 0
  %v760 = vsel %vm440, %v725, 0
  %v763 = vsel %vm440, %v726, 0
  %v766 = vsel %vm440, %v727, 0
  %v769 = vsel %vm440, %v728, 0
  %v772 = vsel %vm440, %v729, 0
  %v775 = vsel %vm440, %v730, 0
  %v778 = vsel %vm440, %v731, 0
  %v781 = vsel %vm440, %v732, 0
  %v784 = vsel %vm440, %v733, 0
  %786 = vmatprep.subr.mxu0 0.0
  %787 = vmatpush1.msra.mxu0 %v38
  %788 = vmatprep.subr.mxu0 0.0
  %789 = vmatpush1.msra.mxu0 %v39
  %790 = vmatprep.subr.mxu0 0.0
  %791 = vmatpush1.msra.mxu0 %v40
  %792 = vmatprep.subr.mxu0 0.0
  %793 = vmatpush1.msra.mxu0 %v41
  %794 = vmatprep.subr.mxu0 0.0
  %795 = vmatpush1.msra.mxu0 0.0
  %796 = vmatprep.subr.mxu0 0.0
  %797 = vmatpush1.msra.mxu0 0.0
  %798 = vmatprep.subr.mxu0 0.0
  %799 = vmatpush1.msra.mxu0 0.0
  %800 = vmatprep.subr.mxu0 0.0
  %801 = vmatpush1.msra.mxu0 0.0
  %802 = vmatprep.subr.mxu0 0.0
  %803 = vmatpush1.msra.mxu0 0.0
  %804 = vmatprep.subr.mxu0 0.0
  %805 = vmatpush1.msra.mxu0 0.0
  %806 = vmatprep.subr.mxu0 0.0
  %807 = vmatpush1.msra.mxu0 0.0
  %808 = vmatprep.subr.mxu0 0.0
  %809 = vmatpush1.msra.mxu0 0.0
  %810 = vmatprep.subr.mxu0 0.0
  %811 = vmatpush1.msra.mxu0 0.0
  %812 = vmatprep.subr.mxu0 0.0
  %813 = vmatpush1.msra.mxu0 0.0
  %814 = vmatprep.subr.mxu0 0.0
  %815 = vmatpush1.msra.mxu0 0.0
  %816 = vmatprep.subr.mxu0 0.0
  %817 = vmatpush1.msra.mxu0 0.0
  %818 = vmatprep.subr.mxu0 0.0
  %819 = vmatpush1.msra.mxu0 0.0
  %820 = vmatprep.subr.mxu0 0.0
  %821 = vmatpush1.msra.mxu0 0.0
  %822 = vmatprep.subr.mxu0 0.0
  %823 = vmatpush1.msra.mxu0 0.0
  %824 = vmatprep.subr.mxu0 0.0
  %825 = vmatpush1.msra.mxu0 0.0
  %826 = vmatprep.subr.mxu0 0.0
  %827 = vmatpush1.msra.mxu0 0.0
  %828 = vmatprep.subr.mxu0 0.0
  %829 = vmatpush1.msra.mxu0 0.0
  %830 = vmatprep.subr.mxu0 0.0
  %831 = vmatpush1.msra.mxu0 0.0
  %832 = vmatprep.subr.mxu0 0.0
  %833 = vmatpush1.msra.mxu0 0.0
  %834 = vmatprep.subr.mxu0 0.0
  %835 = vmatpush1.msra.mxu0 0.0
  %836 = vmatprep.subr.mxu0 0.0
  %837 = vmatpush1.msra.mxu0 0.0
  %838 = vmatprep.subr.mxu0 0.0
  %839 = vmatpush1.msra.mxu0 0.0
  %840 = vmatprep.subr.mxu0 0.0
  %841 = vmatpush1.msra.mxu0 0.0
  %842 = vmatprep.subr.mxu0 0.0
  %843 = vmatpush1.msra.mxu0 0.0
  %844 = vmatprep.subr.mxu0 0.0
  %845 = vmatpush1.msra.mxu0 0.0
  %846 = vmatprep.subr.mxu0 0.0
  %847 = vmatpush1.msra.mxu0 0.0
  %848 = vmatprep.subr.mxu0 0.0
  %849 = vmatpush1.msra.mxu0 0.0
  %850 = vmatprep.mubr.f32.mxu0 0.0
  %851 = vmatmul.mubr.f32.gmra.mrb[0].mxu0 %v739
  %v852 = vpop.f32.mrb[0].mxu0
  %v853 = vadd.f32 %v737, %v852
  %v854 = vpop.f32.mrb[0].mxu0
  %855 = vmatprep.mubr.f32.mxu0 0.0
  %856 = vmatmul.mubr.f32.gmra.mrb[0].mxu0 %v742
  %v857 = vpop.f32.mrb[0].mxu0
  %v858 = vadd.f32 %v737, %v857
  %v859 = vpop.f32.mrb[0].mxu0
  %860 = vmatprep.mubr.f32.mxu0 0.0
  %861 = vmatmul.mubr.f32.gmra.mrb[0].mxu0 %v745
  %v862 = vpop.f32.mrb[0].mxu0
  %v863 = vadd.f32 %v737, %v862
  %v864 = vpop.f32.mrb[0].mxu0
  %865 = vmatprep.mubr.f32.mxu0 0.0
  %866 = vmatmul.mubr.f32.gmra.mrb[0].mxu0 %v748
  %v867 = vpop.f32.mrb[0].mxu0
  %v868 = vadd.f32 %v737, %v867
  %v869 = vpop.f32.mrb[0].mxu0
  %870 = vmatprep.mubr.f32.mxu0 0.0
  %871 = vmatmul.mubr.f32.gmra.mrb[0].mxu0 %v751
  %v872 = vpop.f32.mrb[0].mxu0
  %v873 = vadd.f32 %v737, %v872
  %v874 = vpop.f32.mrb[0].mxu0
  %875 = vmatprep.mubr.f32.mxu0 0.0
  %876 = vmatmul.mubr.f32.gmra.mrb[0].mxu0 %v754
  %v877 = vpop.f32.mrb[0].mxu0
  %v878 = vadd.f32 %v737, %v877
  %v879 = vpop.f32.mrb[0].mxu0
  %880 = vmatprep.mubr.f32.mxu0 0.0
  %881 = vmatmul.mubr.f32.gmra.mrb[0].mxu0 %v757
  %v882 = vpop.f32.mrb[0].mxu0
  %v883 = vadd.f32 %v737, %v882
  %v884 = vpop.f32.mrb[0].mxu0
  %885 = vmatprep.mubr.f32.mxu0 0.0
  %886 = vmatmul.mubr.f32.gmra.mrb[0].mxu0 %v760
  %v887 = vpop.f32.mrb[0].mxu0
  %v888 = vadd.f32 %v737, %v887
  %v889 = vpop.f32.mrb[0].mxu0
  %890 = vmatprep.mubr.f32.mxu0 0.0
  %891 = vmatmul.mubr.f32.gmra.mrb[0].mxu0 %v763
  %v892 = vpop.f32.mrb[0].mxu0
  %v893 = vadd.f32 %v737, %v892
  %v894 = vpop.f32.mrb[0].mxu0
  %895 = vmatprep.mubr.f32.mxu0 0.0
  %896 = vmatmul.mubr.f32.gmra.mrb[0].mxu0 %v766
  %v897 = vpop.f32.mrb[0].mxu0
  %v898 = vadd.f32 %v737, %v897
  %v899 = vpop.f32.mrb[0].mxu0
  %900 = vmatprep.mubr.f32.mxu0 0.0
  %901 = vmatmul.mubr.f32.gmra.mrb[0].mxu0 %v769
  %v902 = vpop.f32.mrb[0].mxu0
  %v903 = vadd.f32 %v737, %v902
  %v904 = vpop.f32.mrb[0].mxu0
  %905 = vmatprep.mubr.f32.mxu0 0.0
  %906 = vmatmul.mubr.f32.gmra.mrb[0].mxu0 %v772
  %v907 = vpop.f32.mrb[0].mxu0
  %v908 = vadd.f32 %v737, %v907
  %v909 = vpop.f32.mrb[0].mxu0
  %910 = vmatprep.mubr.f32.mxu0 0.0
  %911 = vmatmul.mubr.f32.gmra.mrb[0].mxu0 %v775
  %v912 = vpop.f32.mrb[0].mxu0
  %v913 = vadd.f32 %v737, %v912
  %v914 = vpop.f32.mrb[0].mxu0
  %915 = vmatprep.mubr.f32.mxu0 0.0
  %916 = vmatmul.mubr.f32.gmra.mrb[0].mxu0 %v778
  %v917 = vpop.f32.mrb[0].mxu0
  %v918 = vadd.f32 %v737, %v917
  %v919 = vpop.f32.mrb[0].mxu0
  %920 = vmatprep.mubr.f32.mxu0 0.0
  %921 = vmatmul.mubr.f32.gmra.mrb[0].mxu0 %v781
  %v922 = vpop.f32.mrb[0].mxu0
  %v923 = vadd.f32 %v737, %v922
  %v924 = vpop.f32.mrb[0].mxu0
  %925 = vmatprep.mubr.f32.mxu0 0.0
  %926 = vmatmul.mubr.f32.gmra.mrb[0].mxu0 %v784
  %v927 = vpop.f32.mrb[0].mxu0
  %v928 = vadd.f32 %v737, %v927
  %v929 = vpop.f32.mrb[0].mxu0
  %930 = vdwg.mxu0
  %v931 = vtanh.pop %v853
  %v932 = vtanh.pop %v858
  %v933 = vtanh.pop %v863
  %v934 = vtanh.pop %v868
  %v935 = vtanh.pop %v873
  %v936 = vtanh.pop %v878
  %v937 = vtanh.pop %v883
  %v938 = vtanh.pop %v888
  %v939 = vtanh.pop %v893
  %v940 = vtanh.pop %v898
  %v941 = vtanh.pop %v903
  %v942 = vtanh.pop %v908
  %v943 = vtanh.pop %v913
  %v944 = vtanh.pop %v918
  %v945 = vtanh.pop %v923
  %v946 = vtanh.pop %v928
  %v947 = vlaneseq
  %v948 = vshrl.u32 %v947, 7
  %v949 = vsub.s32 0, %v948
  %v950 = vrot.slane %v47, %v949
  %v952 = vsel %vm440, %v931, 0
  %v955 = vsel %vm440, %v932, 0
  %v958 = vsel %vm440, %v933, 0
  %v961 = vsel %vm440, %v934, 0
  %v964 = vsel %vm440, %v935, 0
  %v967 = vsel %vm440, %v936, 0
  %v970 = vsel %vm440, %v937, 0
  %v973 = vsel %vm440, %v938, 0
  %v976 = vsel %vm440, %v939, 0
  %v979 = vsel %vm440, %v940, 0
  %v982 = vsel %vm440, %v941, 0
  %v985 = vsel %vm440, %v942, 0
  %v988 = vsel %vm440, %v943, 0
  %v991 = vsel %vm440, %v944, 0
  %v994 = vsel %vm440, %v945, 0
  %v997 = vsel %vm440, %v946, 0
  %999 = vmatprep.subr.mxu0 0.0
  %1000 = vmatpush1.msra.mxu0 %v43
  %1001 = vmatprep.subr.mxu0 0.0
  %1002 = vmatpush1.msra.mxu0 %v44
  %1003 = vmatprep.subr.mxu0 0.0
  %1004 = vmatpush1.msra.mxu0 %v45
  %1005 = vmatprep.subr.mxu0 0.0
  %1006 = vmatpush1.msra.mxu0 %v46
  %1007 = vmatprep.subr.mxu0 0.0
  %1008 = vmatpush1.msra.mxu0 0.0
  %1009 = vmatprep.subr.mxu0 0.0
  %1010 = vmatpush1.msra.mxu0 0.0
  %1011 = vmatprep.subr.mxu0 0.0
  %1012 = vmatpush1.msra.mxu0 0.0
  %1013 = vmatprep.subr.mxu0 0.0
  %1014 = vmatpush1.msra.mxu0 0.0
  %1015 = vmatprep.subr.mxu0 0.0
  %1016 = vmatpush1.msra.mxu0 0.0
  %1017 = vmatprep.subr.mxu0 0.0
  %1018 = vmatpush1.msra.mxu0 0.0
  %1019 = vmatprep.subr.mxu0 0.0
  %1020 = vmatpush1.msra.mxu0 0.0
  %1021 = vmatprep.subr.mxu0 0.0
  %1022 = vmatpush1.msra.mxu0 0.0
  %1023 = vmatprep.subr.mxu0 0.0
  %1024 = vmatpush1.msra.mxu0 0.0
  %1025 = vmatprep.subr.mxu0 0.0
  %1026 = vmatpush1.msra.mxu0 0.0
  %1027 = vmatprep.subr.mxu0 0.0
  %1028 = vmatpush1.msra.mxu0 0.0
  %1029 = vmatprep.subr.mxu0 0.0
  %1030 = vmatpush1.msra.mxu0 0.0
  %1031 = vmatprep.subr.mxu0 0.0
  %1032 = vmatpush1.msra.mxu0 0.0
  %1033 = vmatprep.subr.mxu0 0.0
  %1034 = vmatpush1.msra.mxu0 0.0
  %1035 = vmatprep.subr.mxu0 0.0
  %1036 = vmatpush1.msra.mxu0 0.0
  %1037 = vmatprep.subr.mxu0 0.0
  %1038 = vmatpush1.msra.mxu0 0.0
  %1039 = vmatprep.subr.mxu0 0.0
  %1040 = vmatpush1.msra.mxu0 0.0
  %1041 = vmatprep.subr.mxu0 0.0
  %1042 = vmatpush1.msra.mxu0 0.0
  %1043 = vmatprep.subr.mxu0 0.0
  %1044 = vmatpush1.msra.mxu0 0.0
  %1045 = vmatprep.subr.mxu0 0.0
  %1046 = vmatpush1.msra.mxu0 0.0
  %1047 = vmatprep.subr.mxu0 0.0
  %1048 = vmatpush1.msra.mxu0 0.0
  %1049 = vmatprep.subr.mxu0 0.0
  %1050 = vmatpush1.msra.mxu0 0.0
  %1051 = vmatprep.subr.mxu0 0.0
  %1052 = vmatpush1.msra.mxu0 0.0
  %1053 = vmatprep.subr.mxu0 0.0
  %1054 = vmatpush1.msra.mxu0 0.0
  %1055 = vmatprep.subr.mxu0 0.0
  %1056 = vmatpush1.msra.mxu0 0.0
  %1057 = vmatprep.subr.mxu0 0.0
  %1058 = vmatpush1.msra.mxu0 0.0
  %1059 = vmatprep.subr.mxu0 0.0
  %1060 = vmatpush1.msra.mxu0 0.0
  %1061 = vmatprep.subr.mxu0 0.0
  %1062 = vmatpush1.msra.mxu0 0.0
  %1063 = vmatprep.mubr.f32.mxu0 0.0
  %1064 = vmatmul.mubr.f32.gmra.mrb[0].mxu0 %v952
  %v1065 = vpop.f32.mrb[0].mxu0
  %v1066 = vadd.f32 %v950, %v1065
  %v1067 = vpop.f32.mrb[0].mxu0
  %1068 = vmatprep.mubr.f32.mxu0 0.0
  %1069 = vmatmul.mubr.f32.gmra.mrb[0].mxu0 %v955
  %v1070 = vpop.f32.mrb[0].mxu0
  %v1071 = vadd.f32 %v950, %v1070
  %v1072 = vpop.f32.mrb[0].mxu0
  %1073 = vmatprep.mubr.f32.mxu0 0.0
  %1074 = vmatmul.mubr.f32.gmra.mrb[0].mxu0 %v958
  %v1075 = vpop.f32.mrb[0].mxu0
  %v1076 = vadd.f32 %v950, %v1075
  %v1077 = vpop.f32.mrb[0].mxu0
  %1078 = vmatprep.mubr.f32.mxu0 0.0
  %1079 = vmatmul.mubr.f32.gmra.mrb[0].mxu0 %v961
  %v1080 = vpop.f32.mrb[0].mxu0
  %v1081 = vadd.f32 %v950, %v1080
  %v1082 = vpop.f32.mrb[0].mxu0
  %1083 = vmatprep.mubr.f32.mxu0 0.0
  %1084 = vmatmul.mubr.f32.gmra.mrb[0].mxu0 %v964
  %v1085 = vpop.f32.mrb[0].mxu0
  %v1086 = vadd.f32 %v950, %v1085
  %v1087 = vpop.f32.mrb[0].mxu0
  %1088 = vmatprep.mubr.f32.mxu0 0.0
  %1089 = vmatmul.mubr.f32.gmra.mrb[0].mxu0 %v967
  %v1090 = vpop.f32.mrb[0].mxu0
  %v1091 = vadd.f32 %v950, %v1090
  %v1092 = vpop.f32.mrb[0].mxu0
  %1093 = vmatprep.mubr.f32.mxu0 0.0
  %1094 = vmatmul.mubr.f32.gmra.mrb[0].mxu0 %v970
  %v1095 = vpop.f32.mrb[0].mxu0
  %v1096 = vadd.f32 %v950, %v1095
  %v1097 = vpop.f32.mrb[0].mxu0
  %1098 = vmatprep.mubr.f32.mxu0 0.0
  %1099 = vmatmul.mubr.f32.gmra.mrb[0].mxu0 %v973
  %v1100 = vpop.f32.mrb[0].mxu0
  %v1101 = vadd.f32 %v950, %v1100
  %v1102 = vpop.f32.mrb[0].mxu0
  %1103 = vmatprep.mubr.f32.mxu0 0.0
  %1104 = vmatmul.mubr.f32.gmra.mrb[0].mxu0 %v976
  %v1105 = vpop.f32.mrb[0].mxu0
  %v1106 = vadd.f32 %v950, %v1105
  %v1107 = vpop.f32.mrb[0].mxu0
  %1108 = vmatprep.mubr.f32.mxu0 0.0
  %1109 = vmatmul.mubr.f32.gmra.mrb[0].mxu0 %v979
  %v1110 = vpop.f32.mrb[0].mxu0
  %v1111 = vadd.f32 %v950, %v1110
  %v1112 = vpop.f32.mrb[0].mxu0
  %1113 = vmatprep.mubr.f32.mxu0 0.0
  %1114 = vmatmul.mubr.f32.gmra.mrb[0].mxu0 %v982
  %v1115 = vpop.f32.mrb[0].mxu0
  %v1116 = vadd.f32 %v950, %v1115
  %v1117 = vpop.f32.mrb[0].mxu0
  %1118 = vmatprep.mubr.f32.mxu0 0.0
  %1119 = vmatmul.mubr.f32.gmra.mrb[0].mxu0 %v985
  %v1120 = vpop.f32.mrb[0].mxu0
  %v1121 = vadd.f32 %v950, %v1120
  %v1122 = vpop.f32.mrb[0].mxu0
  %1123 = vmatprep.mubr.f32.mxu0 0.0
  %1124 = vmatmul.mubr.f32.gmra.mrb[0].mxu0 %v988
  %v1125 = vpop.f32.mrb[0].mxu0
  %v1126 = vadd.f32 %v950, %v1125
  %v1127 = vpop.f32.mrb[0].mxu0
  %1128 = vmatprep.mubr.f32.mxu0 0.0
  %1129 = vmatmul.mubr.f32.gmra.mrb[0].mxu0 %v991
  %v1130 = vpop.f32.mrb[0].mxu0
  %v1131 = vadd.f32 %v950, %v1130
  %v1132 = vpop.f32.mrb[0].mxu0
  %1133 = vmatprep.mubr.f32.mxu0 0.0
  %1134 = vmatmul.mubr.f32.gmra.mrb[0].mxu0 %v994
  %v1135 = vpop.f32.mrb[0].mxu0
  %v1136 = vadd.f32 %v950, %v1135
  %v1137 = vpop.f32.mrb[0].mxu0
  %1138 = vmatprep.mubr.f32.mxu0 0.0
  %1139 = vmatmul.mubr.f32.gmra.mrb[0].mxu0 %v997
  %v1140 = vpop.f32.mrb[0].mxu0
  %v1141 = vadd.f32 %v950, %v1140
  %v1142 = vpop.f32.mrb[0].mxu0
  %1143 = vdwg.mxu0
  %v1144 = vlaneseq
  %v1145 = vand.u32 %v1144, 127
  %v1146 = vmax.f32 %v1066, -7.0
  %v1147 = vmax.f32 %v1071, -7.0
  %v1148 = vmax.f32 %v1076, -7.0
  %v1149 = vmax.f32 %v1081, -7.0
  %v1150 = vmax.f32 %v1086, -7.0
  %v1151 = vmax.f32 %v1091, -7.0
  %v1152 = vmax.f32 %v1096, -7.0
  %v1153 = vmax.f32 %v1101, -7.0
  %v1154 = vmax.f32 %v1106, -7.0
  %v1155 = vmax.f32 %v1111, -7.0
  %v1156 = vmax.f32 %v1116, -7.0
  %v1157 = vmax.f32 %v1121, -7.0
  %v1158 = vmax.f32 %v1126, -7.0
  %v1159 = vmax.f32 %v1131, -7.0
  %v1160 = vmax.f32 %v1136, -7.0
  %v1161 = vmax.f32 %v1141, -7.0
  %v1162 = vmin.f32 %v1146, 2.0
  %v1163 = vmin.f32 %v1147, 2.0
  %v1164 = vmin.f32 %v1148, 2.0
  %v1165 = vmin.f32 %v1149, 2.0
  %v1166 = vmin.f32 %v1150, 2.0
  %v1167 = vmin.f32 %v1151, 2.0
  %v1168 = vmin.f32 %v1152, 2.0
  %v1169 = vmin.f32 %v1153, 2.0
  %v1170 = vmin.f32 %v1154, 2.0
  %v1171 = vmin.f32 %v1155, 2.0
  %v1172 = vmin.f32 %v1156, 2.0
  %v1173 = vmin.f32 %v1157, 2.0
  %v1174 = vmin.f32 %v1158, 2.0
  %v1175 = vmin.f32 %v1159, 2.0
  %v1176 = vmin.f32 %v1160, 2.0
  %v1177 = vmin.f32 %v1161, 2.0
  %vm1178 = vcmp.lt.s32.totalorder %v1145, 4
  %vm1179 = vcmp.lt.s32.totalorder %v1145, 8
  %v1180 = vmul.f32 %v1162, 1.442695
  %v1181 = vpow.pop %v1180
  %v1182 = vmul.f32 %v1163, 1.442695
  %v1183 = vpow.pop %v1182
  %v1184 = vmul.f32 %v1164, 1.442695
  %v1185 = vpow.pop %v1184
  %v1186 = vmul.f32 %v1165, 1.442695
  %v1187 = vpow.pop %v1186
  %v1188 = vmul.f32 %v1166, 1.442695
  %v1189 = vpow.pop %v1188
  %v1190 = vmul.f32 %v1167, 1.442695
  %v1191 = vpow.pop %v1190
  %v1192 = vmul.f32 %v1168, 1.442695
  %v1193 = vpow.pop %v1192
  %v1194 = vmul.f32 %v1169, 1.442695
  %v1195 = vpow.pop %v1194
  %v1196 = vmul.f32 %v1170, 1.442695
  %v1197 = vpow.pop %v1196
  %v1198 = vmul.f32 %v1171, 1.442695
  %v1199 = vpow.pop %v1198
  %v1200 = vmul.f32 %v1172, 1.442695
  %v1201 = vpow.pop %v1200
  %v1202 = vmul.f32 %v1173, 1.442695
  %v1203 = vpow.pop %v1202
  %v1204 = vmul.f32 %v1174, 1.442695
  %v1205 = vpow.pop %v1204
  %v1206 = vmul.f32 %v1175, 1.442695
  %v1207 = vpow.pop %v1206
  %v1208 = vmul.f32 %v1176, 1.442695
  %v1209 = vpow.pop %v1208
  %v1210 = vmul.f32 %v1177, 1.442695
  %v1211 = vpow.pop %v1210
  %v1212 = vsel %vm1179, %v1181, %v1162
  %v1213 = vsel %vm1179, %v1183, %v1163
  %v1214 = vsel %vm1179, %v1185, %v1164
  %v1215 = vsel %vm1179, %v1187, %v1165
  %v1216 = vsel %vm1179, %v1189, %v1166
  %v1217 = vsel %vm1179, %v1191, %v1167
  %v1218 = vsel %vm1179, %v1193, %v1168
  %v1219 = vsel %vm1179, %v1195, %v1169
  %v1220 = vsel %vm1179, %v1197, %v1170
  %v1221 = vsel %vm1179, %v1199, %v1171
  %v1222 = vsel %vm1179, %v1201, %v1172
  %v1223 = vsel %vm1179, %v1203, %v1173
  %v1224 = vsel %vm1179, %v1205, %v1174
  %v1225 = vsel %vm1179, %v1207, %v1175
  %v1226 = vsel %vm1179, %v1209, %v1176
  %v1227 = vsel %vm1179, %v1211, %v1177
  %v1228 = vsel %vm1178, %v1066, %v1212
  %v1229 = vsel %vm1178, %v1071, %v1213
  %v1230 = vsel %vm1178, %v1076, %v1214
  %v1231 = vsel %vm1178, %v1081, %v1215
  %v1232 = vsel %vm1178, %v1086, %v1216
  %v1233 = vsel %vm1178, %v1091, %v1217
  %v1234 = vsel %vm1178, %v1096, %v1218
  %v1235 = vsel %vm1178, %v1101, %v1219
  %v1236 = vsel %vm1178, %v1106, %v1220
  %v1237 = vsel %vm1178, %v1111, %v1221
  %v1238 = vsel %vm1178, %v1116, %v1222
  %v1239 = vsel %vm1178, %v1121, %v1223
  %v1240 = vsel %vm1178, %v1126, %v1224
  %v1241 = vsel %vm1178, %v1131, %v1225
  %v1242 = vsel %vm1178, %v1136, %v1226
  %v1243 = vsel %vm1178, %v1141, %v1227
  %vm1244 = vcmask 97280
  %1245 = vst.msk [vmem:[%s2] sm:$0xff] %vm1244, %v1228
  %1246 = vst.msk [vmem:[%s2 + $0x8] sm:$0xff] %vm1244, %v1229
  %1247 = vst.msk [vmem:[%s2 + $0x10] sm:$0xff] %vm1244, %v1230
  %1248 = vst.msk [vmem:[%s2 + $0x18] sm:$0xff] %vm1244, %v1231
  %1249 = vst.msk [vmem:[%s2 + $0x20] sm:$0xff] %vm1244, %v1232
  %1250 = vst.msk [vmem:[%s2 + $0x28] sm:$0xff] %vm1244, %v1233
  %1251 = vst.msk [vmem:[%s2 + $0x30] sm:$0xff] %vm1244, %v1234
  %1252 = vst.msk [vmem:[%s2 + $0x38] sm:$0xff] %vm1244, %v1235
  %1253 = vst.msk [vmem:[%s2 + $0x40] sm:$0xff] %vm1244, %v1236
  %1254 = vst.msk [vmem:[%s2 + $0x48] sm:$0xff] %vm1244, %v1237
  %1255 = vst.msk [vmem:[%s2 + $0x50] sm:$0xff] %vm1244, %v1238
  %1256 = vst.msk [vmem:[%s2 + $0x58] sm:$0xff] %vm1244, %v1239
  %1257 = vst.msk [vmem:[%s2 + $0x60] sm:$0xff] %vm1244, %v1240
  %1258 = vst.msk [vmem:[%s2 + $0x68] sm:$0xff] %vm1244, %v1241
  %1259 = vst.msk [vmem:[%s2 + $0x70] sm:$0xff] %vm1244, %v1242
  %1260 = vst.msk [vmem:[%s2 + $0x78] sm:$0xff] %vm1244, %v1243
  // Predicated region
  $region10: #{policy_forward.1} parent=0 // pred_check
    _
  $region11: #{policy_forward.1} parent=0 // pred_check_branch
    %1262 = sbr.rel (0) target = $region13
  $region12: #{policy_forward.1} parent=0 // pred_region
    _
  $region13: #{policy_forward.1} parent=0 // pred_fallthru
    _
  // Predicated region
  $region14: #{policy_forward.1} parent=0 // pred_check
    _
  $region15: #{policy_forward.1} parent=0 // pred_check_branch
    %1264 = sbr.rel (0) target = $region17
  $region16: #{policy_forward.1} parent=0 // pred_region
    _
  $region17: #{policy_forward.1} parent=0 // pred_fallthru
    _

</llo_original>
